<compile_context>
chip_gen: v7x
topology: tpu7x:2x2x1
jax: 0.10.0
libtpu: 0.0.40
codegen_flags: <defaults>
</compile_context>

<pallas_src>
import jax
import jax.numpy as jnp
from jax import lax
from jax.experimental import pallas as pl
from jax.experimental.pallas import tpu as pltpu


# ----------------------------------------------------------------------------
# Pallas kernel: global-average-pool encoder + linear projection + masked-mean
# class-prototype aggregation.  One (d_tile, n_tile) grid step per invocation.
# ----------------------------------------------------------------------------
def _proto_kernel(x_ref, w_ref, b_ref, inds_ref, emb_ref, proto_ref, counts_ref):
    # x_ref     : [tn, C, HW]  support-image tile, native (possibly narrow) dtype
    # w_ref     : [C, td]      encoder projection weight tile (bf16)
    # b_ref     : [1, td]      encoder projection bias tile (f32)
    # inds_ref  : [tn, L]      binary support-label indicators (f32)
    # emb_ref   : [tn, td]     out: pooled image embedding tile (f32)
    # proto_ref : [L, td]      out: class prototypes — resident accumulator over
    #                          the n (last, "arbitrary") grid axis
    # counts_ref: [L, 1]       scratch: per-class support counts (f32)
    n_idx = pl.program_id(1)

    @pl.when(n_idx == 0)
    def _init():
        proto_ref[...] = jnp.zeros_like(proto_ref)
        counts_ref[...] = jnp.zeros_like(counts_ref)

    # encoder.embed_image(..., pool=True): global average pool over spatial.
    # The single narrow->f32 cast happens here (inputs arrive in native dtype).
    x = x_ref[...].astype(jnp.float32)                               # [tn, C, HW]
    pooled = jnp.mean(x, axis=-1)                                    # [tn, C]

    # Linear projection to embedding space: bf16 MXU operands, f32 accumulate.
    emb = jnp.dot(pooled.astype(jnp.bfloat16), w_ref[...],
                  preferred_element_type=jnp.float32) + b_ref[...]   # [tn, td]
    emb_ref[...] = emb

    # class_prototype_aggregator (masked mean), with the unsqueeze/repeat fused
    # away:  proto[l, :] = sum_n inds[n, l] * emb[n, :] / max(count_l, 1)
    inds = inds_ref[...]                                             # [tn, L] f32
    proto_ref[...] += lax.dot_general(
        inds, emb,
        dimension_numbers=(((0,), (0,)), ((), ())),
        preferred_element_type=jnp.float32)                          # [L, td]
    counts_ref[...] += jnp.sum(inds, axis=0)[:, None]                # [L, 1]

    @pl.when(n_idx == pl.num_programs(1) - 1)
    def _finalize():
        inv = pl.reciprocal(jnp.maximum(counts_ref[...], 1.0), approx=True)
        proto_ref[...] = proto_ref[...] * inv                        # [L, td]


def _pick_tiles(n, c, hw, d, x_itemsize, block_n, block_d):
    """Choose (tn, td) grid tiles.

    - tn: full N when the (double-buffered) x block comfortably fits VMEM, else
      the largest multiple-of-8 divisor of N that keeps the block modest.
    - td: split D into two 128-aligned column tiles (one per v7x TensorCore)
      only when x is resident across the whole grid (tn == N), so the dominant
      x DMA is never re-issued per D tile on single-core chips.
    """
    if block_n is not None:
        tn = block_n
    else:
        budget = 8 * 1024 * 1024  # per-buffer x budget; safe on v7x 32 MiB scoped
        if n % 8 != 0 or n * c * hw * x_itemsize <= budget:
            tn = n
        else:
            cands = [t for t in range(8, n + 1, 8)
                     if n % t == 0 and t * c * hw * x_itemsize <= budget]
            tn = max(cands) if cands else n

    if block_d is not None:
        td = block_d
    else:
        td = d // 2 if (tn == n and d % 256 == 0) else d
    return tn, td


def _compute_prototypes(support_images, w_enc, b_enc, support_label_inds,
                        *, block_n=None, block_d=None):
    """support_images: [N, C, H, W]; returns (embeddings [N, D], prototypes [L, D])."""
    n, c, h, w = support_images.shape
    d = w_enc.shape[1]
    l = support_label_inds.shape[1]
    hw = h * w

    # Keep support images in their NATIVE dtype (bf16/u8/f32): no host-side
    # up-cast, so the dominant HBM->VMEM DMA moves the minimum number of bytes.
    x = support_images.reshape(n, c, hw)
    w2 = w_enc.astype(jnp.bfloat16)
    b2 = b_enc.reshape(1, d).astype(jnp.float32)
    inds = support_label_inds.astype(jnp.float32)

    tn, td = _pick_tiles(n, c, hw, d, x.dtype.itemsize, block_n, block_d)
    assert n % tn == 0 and d % td == 0
    assert tn == n or tn % 8 == 0
    assert td == d or td % 128 == 0

    grid = (d // td, n // tn)  # (parallel D tiles, arbitrary/reduction N tiles)

    emb, proto = pl.pallas_call(
        _proto_kernel,
        grid=grid,
        in_specs=[
            pl.BlockSpec((tn, c, hw), lambda di, ni: (ni, 0, 0)),
            pl.BlockSpec((c, td), lambda di, ni: (0, di)),
            pl.BlockSpec((1, td), lambda di, ni: (0, di)),
            pl.BlockSpec((tn, l), lambda di, ni: (ni, 0)),
        ],
        out_specs=[
            pl.BlockSpec((tn, td), lambda di, ni: (ni, di)),
            pl.BlockSpec((l, td), lambda di, ni: (0, di)),
        ],
        out_shape=[
            jax.ShapeDtypeStruct((n, d), jnp.float32),
            jax.ShapeDtypeStruct((l, d), jnp.float32),
        ],
        scratch_shapes=[pltpu.VMEM((l, 1), jnp.float32)],
        compiler_params=pltpu.CompilerParams(
            dimension_semantics=("parallel", "arbitrary")),
    )(x, w2, b2, inds)
    return emb, proto


# ----------------------------------------------------------------------------
# MetaModelBase equivalent
# ----------------------------------------------------------------------------
class MetaModelBasePallas:
    def __init__(self, channels, embed_dim, key):
        # Synthetic, deterministic "imgtxt_encoder" parameters: a global-pool +
        # linear-projection image encoder.  Weight kept in bf16 (MXU-native,
        # half the DMA/VMEM); bias in f32.
        kw, kb = jax.random.split(key)
        self.w_enc = (jax.random.normal(kw, (channels, embed_dim), jnp.float32)
                      * 0.02).astype(jnp.bfloat16)
        self.b_enc = jax.random.normal(kb, (embed_dim,), jnp.float32) * 0.02
        self.use_variance = False
        self.other_loss_weight = 0
        self.class_prototypes = None
        # TODO(synk): BalAccuracyLoss is not defined in the reference module; loss() not implemented.

    def set_class_prototype_details(self, class_labels, support_images, support_label_inds):
        # TODO(synk): when many episodes are processed per training step, batch them as a
        # leading grid axis of a single pallas_call to amortize launch overhead.
        emb, proto = _compute_prototypes(
            support_images, self.w_enc, self.b_enc, support_label_inds)
        self.image_embeddings = emb
        self.class_prototypes = proto
        # TODO(synk): use_variance branch (class_variance) not implemented (flag is False in __init__).

    def update_support_and_classify(self, class_labels, support_images,
                                    support_label_inds, query_images):
        self.set_class_prototype_details(class_labels, support_images, support_label_inds)
        return self.forward(query_images)

    def forward(self, query_images):
        # @abstractmethod in the reference module; base implementation returns
        # the query images twice.
        return (query_images, query_images)


if __name__ == "__main__":
    key = jax.random.PRNGKey(0)
    k_model, k_sup, k_qry, k_lbl = jax.random.split(key, 4)

    N, C, H, W = 16, 4, 16, 16     # support set (NCHW)
    L = 8                          # number of classes
    D = 256                        # embedding dim
    B = 2                          # query batch

    # Support images kept in a narrow native dtype (bf16): the kernel casts once.
    support_images = jax.random.normal(
        k_sup, (N, C, H, W), jnp.float32).astype(jnp.bfloat16)
    query_images = jax.random.normal(k_qry, (B, C, H, W), jnp.float32)
    # Binary multi-hot support label indicators [N, L].
    support_label_inds = (
        jax.random.uniform(k_lbl, (N, L)) > 0.5).astype(jnp.float32)
    class_labels = list(range(L))

    model = MetaModelBasePallas(channels=C, embed_dim=D, key=k_model)
    out = model.update_support_and_classify(
        class_labels, support_images, support_label_inds, query_images)

    jax.block_until_ready(model.class_prototypes)
    jax.block_until_ready(model.image_embeddings)
    jax.block_until_ready(out)

    # Pure-JAX reference of the same math (bf16 projection, f32 accumulation).
    pooled_ref = support_images.astype(jnp.float32).reshape(N, C, H * W).mean(-1)
    emb_ref = jnp.dot(pooled_ref.astype(jnp.bfloat16), model.w_enc,
                      preferred_element_type=jnp.float32) + model.b_enc
    sums_ref = support_label_inds.T @ emb_ref
    counts_ref = jnp.maximum(support_label_inds.sum(0)[:, None], 1.0)
    proto_ref = sums_ref / counts_ref

    assert jnp.allclose(model.image_embeddings, emb_ref, atol=2e-3, rtol=2e-3)
    assert jnp.allclose(model.class_prototypes, proto_ref, atol=1e-2, rtol=1e-2)

    # Also exercise the N-tiled (multi-step "arbitrary" axis) accumulator path.
    emb2, proto2 = _compute_prototypes(
        support_images, model.w_enc, model.b_enc, support_label_inds,
        block_n=8, block_d=128)
    jax.block_until_ready(proto2)
    assert jnp.allclose(emb2, emb_ref, atol=2e-3, rtol=2e-3)
    assert jnp.allclose(proto2, proto_ref, atol=1e-2, rtol=1e-2)

    assert out[0].shape == query_images.shape and out[1].shape == query_images.shape

    print("KERNEL_OK")
</pallas_src>

<mosaic_0001>
module attributes {stable_mosaic.version = 11 : i64} {
  func.func @_proto_kernel(%arg0: i32, %arg1: i32, %arg2: memref<16x4x256xbf16, #tpu.memory_space<vmem>>, %arg3: memref<4x128xbf16, #tpu.memory_space<vmem>>, %arg4: memref<1x128xf32, #tpu.memory_space<vmem>>, %arg5: memref<16x8xf32, #tpu.memory_space<vmem>>, %arg6: memref<16x128xf32, #tpu.memory_space<vmem>>, %arg7: memref<8x128xf32, #tpu.memory_space<vmem>>, %arg8: memref<8x1xf32, #tpu.memory_space<vmem>>) attributes {dimension_semantics = [#tpu.dimension_semantics<parallel>, #tpu.dimension_semantics<arbitrary>], iteration_bounds = array<i64: 2, 1>, scalar_prefetch = 0 : i64, scratch_operands = 1 : i64, tpu.core_type = #tpu.core_type<tc>, window_params = [{transform_indices = @transform_0, window_bounds = array<i64: 16, 4, 256>}, {transform_indices = @transform_1, window_bounds = array<i64: 4, 128>}, {transform_indices = @transform_2, window_bounds = array<i64: 1, 128>}, {transform_indices = @transform_3, window_bounds = array<i64: 16, 8>}, {transform_indices = @transform_4, window_bounds = array<i64: 16, 128>}, {transform_indices = @transform_5, window_bounds = array<i64: 8, 128>}]} {
    %c0_i32 = arith.constant 0 : i32
    %0 = arith.cmpi eq, %arg1, %c0_i32 : i32
    %1 = arith.extui %0 : i1 to i32
    %c0_i32_0 = arith.constant 0 : i32
    %2 = arith.cmpi ne, %1, %c0_i32_0 : i32
    scf.if %2 {
      %cst_25 = arith.constant 0.000000e+00 : f32
      %28 = vector.broadcast %cst_25 : f32 to vector<8x128xf32>
      %c0_26 = arith.constant 0 : index
      %c0_27 = arith.constant 0 : index
      %29 = vector.load %arg7[%c0_26, %c0_27] : memref<8x128xf32, #tpu.memory_space<vmem>>, vector<8x128xf32>
      tpu.vector_store %arg7[%c0_26, %c0_27], %28 {strides = array<i32>} : memref<8x128xf32, #tpu.memory_space<vmem>>, vector<8x128xf32>,
      %cst_28 = arith.constant 0.000000e+00 : f32
      %30 = vector.broadcast %cst_28 : f32 to vector<8x1xf32>
      %c0_29 = arith.constant 0 : index
      %c0_30 = arith.constant 0 : index
      %31 = vector.load %arg8[%c0_29, %c0_30] : memref<8x1xf32, #tpu.memory_space<vmem>>, vector<8x1xf32>
      tpu.vector_store %arg8[%c0_29, %c0_30], %30 {strides = array<i32>} : memref<8x1xf32, #tpu.memory_space<vmem>>, vector<8x1xf32>,
    } else {
    }
    %c0 = arith.constant 0 : index
    %c0_1 = arith.constant 0 : index
    %c0_2 = arith.constant 0 : index
    %3 = vector.load %arg2[%c0, %c0_1, %c0_2] : memref<16x4x256xbf16, #tpu.memory_space<vmem>>, vector<16x4x256xbf16>
    %4 = arith.extf %3 : vector<16x4x256xbf16> to vector<16x4x256xf32>
    %cst = arith.constant dense<0.000000e+00> : vector<16x4xf32>
    %5 = vector.multi_reduction <add>, %4, %cst [2] : vector<16x4x256xf32> to vector<16x4xf32>
    %cst_3 = arith.constant 2.560000e+02 : f32
    %6 = vector.broadcast %cst_3 : f32 to vector<16x4xf32>
    %7 = arith.divf %5, %6 : vector<16x4xf32>
    %8 = arith.truncf %7 : vector<16x4xf32> to vector<16x4xbf16>
    %c0_4 = arith.constant 0 : index
    %c0_5 = arith.constant 0 : index
    %9 = vector.load %arg3[%c0_4, %c0_5] : memref<4x128xbf16, #tpu.memory_space<vmem>>, vector<4x128xbf16>
    %cst_6 = arith.constant dense<0.000000e+00> : vector<16x128xf32>
    %10 = tpu.matmul %8, %9, %cst_6 {dimension_numbers = #tpu.dot_dimension_numbers<[1], [0], [0], [1], [0, 0, 1, 1], [], []>} : vector<16x4xbf16>, vector<4x128xbf16>, vector<16x128xf32> -> vector<16x128xf32>
    %c0_7 = arith.constant 0 : index
    %c0_8 = arith.constant 0 : index
    %11 = vector.load %arg4[%c0_7, %c0_8] : memref<1x128xf32, #tpu.memory_space<vmem>>, vector<1x128xf32>
    %12 = vector.broadcast %11 : vector<1x128xf32> to vector<16x128xf32>
    %13 = arith.addf %10, %12 : vector<16x128xf32>
    %c0_9 = arith.constant 0 : index
    %c0_10 = arith.constant 0 : index
    %14 = vector.load %arg6[%c0_9, %c0_10] : memref<16x128xf32, #tpu.memory_space<vmem>>, vector<16x128xf32>
    tpu.vector_store %arg6[%c0_9, %c0_10], %13 {strides = array<i32>} : memref<16x128xf32, #tpu.memory_space<vmem>>, vector<16x128xf32>,
    %c0_11 = arith.constant 0 : index
    %c0_12 = arith.constant 0 : index
    %15 = vector.load %arg5[%c0_11, %c0_12] : memref<16x8xf32, #tpu.memory_space<vmem>>, vector<16x8xf32>
    %c0_13 = arith.constant 0 : index
    %c0_14 = arith.constant 0 : index
    %16 = vector.load %arg7[%c0_13, %c0_14] : memref<8x128xf32, #tpu.memory_space<vmem>>, vector<8x128xf32>
    %cst_15 = arith.constant dense<0.000000e+00> : vector<8x128xf32>
    %17 = tpu.matmul %15, %13, %cst_15 {dimension_numbers = #tpu.dot_dimension_numbers<[0], [0], [1], [1], [0, 1, 1, 1], [], []>} : vector<16x8xf32>, vector<16x128xf32>, vector<8x128xf32> -> vector<8x128xf32>
    %18 = arith.addf %16, %17 : vector<8x128xf32>
    %c0_16 = arith.constant 0 : index
    %c0_17 = arith.constant 0 : index
    %19 = vector.load %arg7[%c0_16, %c0_17] : memref<8x128xf32, #tpu.memory_space<vmem>>, vector<8x128xf32>
    tpu.vector_store %arg7[%c0_16, %c0_17], %18 {strides = array<i32>} : memref<8x128xf32, #tpu.memory_space<vmem>>, vector<8x128xf32>,
    %c0_18 = arith.constant 0 : index
    %c0_19 = arith.constant 0 : index
    %20 = vector.load %arg8[%c0_18, %c0_19] : memref<8x1xf32, #tpu.memory_space<vmem>>, vector<8x1xf32>
    %cst_20 = arith.constant dense<0.000000e+00> : vector<8xf32>
    %21 = vector.multi_reduction <add>, %15, %cst_20 [0] : vector<16x8xf32> to vector<8xf32>
    %22 = vector.shape_cast %21 : vector<8xf32> to vector<8x1xf32>
    %23 = arith.addf %20, %22 : vector<8x1xf32>
    %c0_21 = arith.constant 0 : index
    %c0_22 = arith.constant 0 : index
    %24 = vector.load %arg8[%c0_21, %c0_22] : memref<8x1xf32, #tpu.memory_space<vmem>>, vector<8x1xf32>
    tpu.vector_store %arg8[%c0_21, %c0_22], %23 {strides = array<i32>} : memref<8x1xf32, #tpu.memory_space<vmem>>, vector<8x1xf32>,
    %c0_i32_23 = arith.constant 0 : i32
    %25 = arith.cmpi eq, %arg1, %c0_i32_23 : i32
    %26 = arith.extui %25 : i1 to i32
    %c0_i32_24 = arith.constant 0 : i32
    %27 = arith.cmpi ne, %26, %c0_i32_24 : i32
    scf.if %27 {
      %c0_25 = arith.constant 0 : index
      %c0_26 = arith.constant 0 : index
      %28 = vector.load %arg8[%c0_25, %c0_26] : memref<8x1xf32, #tpu.memory_space<vmem>>, vector<8x1xf32>
      %cst_27 = arith.constant 1.000000e+00 : f32
      %29 = vector.broadcast %cst_27 : f32 to vector<8x1xf32>
      %30 = arith.maximumf %28, %29 : vector<8x1xf32>
      %31 = tpu.reciprocal %30 {approx = true} : vector<8x1xf32> -> vector<8x1xf32>
      %c0_28 = arith.constant 0 : index
      %c0_29 = arith.constant 0 : index
      %32 = vector.load %arg7[%c0_28, %c0_29] : memref<8x128xf32, #tpu.memory_space<vmem>>, vector<8x128xf32>
      %33 = vector.broadcast %31 : vector<8x1xf32> to vector<8x128xf32>
      %34 = arith.mulf %32, %33 : vector<8x128xf32>
      %c0_30 = arith.constant 0 : index
      %c0_31 = arith.constant 0 : index
      %35 = vector.load %arg7[%c0_30, %c0_31] : memref<8x128xf32, #tpu.memory_space<vmem>>, vector<8x128xf32>
      tpu.vector_store %arg7[%c0_30, %c0_31], %34 {strides = array<i32>} : memref<8x128xf32, #tpu.memory_space<vmem>>, vector<8x128xf32>,
    } else {
    }
    return
  }
  func.func @transform_0(%arg0: i32, %arg1: i32) -> (i32, i32, i32) {
    %c0_i32 = arith.constant 0 : i32
    %c0_i32_0 = arith.constant 0 : i32
    %c0_i32_1 = arith.constant 0 : i32
    return %arg1, %c0_i32, %c0_i32_0 : i32, i32, i32
  }
  func.func @transform_1(%arg0: i32, %arg1: i32) -> (i32, i32) {
    %c0_i32 = arith.constant 0 : i32
    %c0_i32_0 = arith.constant 0 : i32
    return %c0_i32, %arg0 : i32, i32
  }
  func.func @transform_2(%arg0: i32, %arg1: i32) -> (i32, i32) {
    %c0_i32 = arith.constant 0 : i32
    %c0_i32_0 = arith.constant 0 : i32
    return %c0_i32, %arg0 : i32, i32
  }
  func.func @transform_3(%arg0: i32, %arg1: i32) -> (i32, i32) {
    %c0_i32 = arith.constant 0 : i32
    %c0_i32_0 = arith.constant 0 : i32
    return %arg1, %c0_i32 : i32, i32
  }
  func.func @transform_4(%arg0: i32, %arg1: i32) -> (i32, i32) {
    %c0_i32 = arith.constant 0 : i32
    return %arg1, %arg0 : i32, i32
  }
  func.func @transform_5(%arg0: i32, %arg1: i32) -> (i32, i32) {
    %c0_i32 = arith.constant 0 : i32
    %c0_i32_0 = arith.constant 0 : i32
    return %c0_i32, %arg0 : i32, i32
  }
}

</mosaic_0001>

<llo_original>
// kernel: tpu_custom_call.1
$region0: #{tpu_custom_call.1}
  #allocation0 [shape = 'u32[]', space=smem, size = 0x4, offset = 0x4, fixed_abs, tag = 'smem constant byte address 0x4 - core index']
  #allocation1 [shape = 'u32[144,128]{1,0:T(1,128)}', space=vmem, size = 0x12000, scoped, tag = 'internal scratch']
  #allocation2 [shape = 'f32[8,1]{1,0:T(8,128)}', space=vmem, size = 0x1000, scoped, tag = 'scratch operand']
  %s0 = inlined_call_operand.hbm [shape: bf16[16,4,256], index: 0, kind: input, shape index: {}]
  %s1 = inlined_call_operand.vmem [shape: bf16[4,256], index: 1, kind: input, shape index: {}]
  %s2 = inlined_call_operand.vmem [shape: f32[1,256], index: 2, kind: input, shape index: {}]
  %s3 = inlined_call_operand.vmem [shape: f32[16,8], index: 3, kind: input, shape index: {}]
  %s4 = inlined_call_operand.hbm [shape: f32[16,256], index: 4, kind: output, shape index: {0}]
  %s5 = inlined_call_operand.hbm [shape: f32[8,256], index: 5, kind: output, shape index: {1}]
  %6 = xla_tuple %s4, %s5
  %s7 = sld [smem:[#allocation0]]
  $region69: #{tpu_custom_call.1} parent=0
    _
  %s9 = ssub.s32 1, %s7
  %s10 = scalar_select 0, %s9, %s7
  $region1: #{tpu_custom_call.1} parent=0
    #allocation3 [shape = 'u8[32768]{0}', space=vmem, size = 0x8000, scoped, tag = 'input window, operand 0, single buffered']
    #allocation4 [shape = 's32[2]{0}', space=sflag, size = 0x8, scoped, tag = 'scoped memory for tpu_custom_call.1']
    #allocation5 [shape = 's32[2]{0}', space=sflag, size = 0x8, scoped, tag = 'scoped memory for tpu_custom_call.1']
    #allocation6 [shape = 'u8[16384]{0}', space=vmem, size = 0x4000, scoped, tag = 'output window, operand 0']
    #allocation7 [shape = 'u8[8192]{0}', space=vmem, size = 0x2000, scoped, tag = 'output window, operand 1']
    #allocation8 [shape = 's32[2]{0}', space=sflag, size = 0x8, scoped, tag = 'scoped memory for tpu_custom_call.1']
    %11 = vsyncpa [#allocation4], 0
    %12 = vsyncpa [#allocation5], 0
    %s13 = scalar_lea.sflag [#allocation5], 1
    %14 = vsyncpa %s13, 0
    %15 = vsyncpa [#allocation8], 0
    %s16 = scalar_lea.sflag [#allocation8], 1
    %17 = vsyncpa %s16, 0
    loop: start=0, step=1, limit=4
    $region2: #{tpu_custom_call.1} parent=1 // loop_pre_header
      _
    $region3: #{tpu_custom_call.1} parent=1 // loop_header
      %s19 = sphi 0, %s23
      %p20 = scmp.ge.s32.totalorder %s19, 4
      %s26 = sphi 0, %s38
      %s27 = sphi 0, %s34
      %s28 = sphi 0, %s26
      %s29 = sphi 0, %s27
      %s30 = sphi 0, %s28
      %s31 = sphi 0, %s29
      %s41 = sphi 0, %s43
      %s44 = sphi 0, %s41
      %s45 = sphi 0, %s44
      %s61 = sphi 0, %s45
      %s67 = sphi 0, %s69
      %s70 = sphi 0, %s67
      %s71 = sphi 0, %s70
      %s87 = sphi 0, %s71
      %s93 = sphi 0, %s95
      %s96 = sphi 0, %s93
      %s97 = sphi 0, %s96
      %s113 = sphi 0, %s97
      %s119 = sphi 0, %s121
      %s122 = sphi 0, %s119
      %s123 = sphi 0, %s122
      %s139 = sphi 0, %s123
      %s147 = sphi 0, %s149
      %s150 = sphi 0, %s147
      %s151 = sphi 0, %s150
      %s167 = sphi 0, %s151
      %s173 = sphi 0, %s175
      %s176 = sphi 0, %s173
      %s177 = sphi 0, %s176
      %s193 = sphi 0, %s177
    $region4: #{tpu_custom_call.1} parent=1 // loop_header_branch
      %22 = sbr.rel (%p20) target = $region8
    $region5: #{tpu_custom_call.1} parent=1 // loop_body
      %s24 = ssub.s32 %s19, 1
      %s25 = ssub.s32 %s19, 2
      %s32 = sadd.s32 1, %s27
      %p33 = scmp.ge.s32.totalorder %s32, 1
      %s34 = scalar_select %p33, 0, %s32
      %s35 = sadd.s32 1, %s26
      %s36 = scalar_select %p33, %s35, %s26
      %p37 = scmp.ge.s32.totalorder %s36, 2
      %s38 = scalar_select %p37, 0, %s36
      %s39 = ssub.s32 %s27, %s34
      %p40 = scmp.eq.s32.totalorder %s39, 0
      %s42 = sadd.s32 %s41, 1
      %s43 = scalar_select %p40, %s41, %s42
      %p46 = pneg %p40
      %p47 = scmp.eq.s32.totalorder %s19, 1
      %p48 = por %p46, %p47
      %p49 = scmp.ne.s32.totalorder %s41, %s44
      %p50 = scmp.eq.s32.totalorder %s19, 0
      %p51 = por %p49, %p50
      %p52 = scmp.ne.s32.totalorder %s41, %s44
      %p53 = scmp.eq.s32.totalorder %s24, 1
      %p54 = por %p52, %p53
      %p55 = scmp.ne.s32.totalorder %s44, %s45
      %p56 = scmp.eq.s32.totalorder %s24, 0
      %p57 = por %p55, %p56
      %p58 = scmp.ne.s32.totalorder %s44, %s45
      %p59 = scmp.eq.s32.totalorder %s25, 1
      %p60 = por %p58, %p59
      %p62 = scmp.ne.s32.totalorder %s45, %s61
      %p63 = scmp.eq.s32.totalorder %s25, 0
      %p64 = por %p62, %p63
      %s65 = ssub.s32 %s26, %s38
      %p66 = scmp.eq.s32.totalorder %s65, 0
      %s68 = sadd.s32 %s67, 1
      %s69 = scalar_select %p66, %s67, %s68
      %p72 = pneg %p66
      %p73 = scmp.eq.s32.totalorder %s19, 1
      %p74 = por %p72, %p73
      %p75 = scmp.ne.s32.totalorder %s67, %s70
      %p76 = scmp.eq.s32.totalorder %s19, 0
      %p77 = por %p75, %p76
      %p78 = scmp.ne.s32.totalorder %s67, %s70
      %p79 = scmp.eq.s32.totalorder %s24, 1
      %p80 = por %p78, %p79
      %p81 = scmp.ne.s32.totalorder %s70, %s71
      %p82 = scmp.eq.s32.totalorder %s24, 0
      %p83 = por %p81, %p82
      %p84 = scmp.ne.s32.totalorder %s70, %s71
      %p85 = scmp.eq.s32.totalorder %s25, 1
      %p86 = por %p84, %p85
      %p88 = scmp.ne.s32.totalorder %s71, %s87
      %p89 = scmp.eq.s32.totalorder %s25, 0
      %p90 = por %p88, %p89
      %s91 = ssub.s32 %s26, %s38
      %p92 = scmp.eq.s32.totalorder %s91, 0
      %s94 = sadd.s32 %s93, 1
      %s95 = scalar_select %p92, %s93, %s94
      %p98 = pneg %p92
      %p99 = scmp.eq.s32.totalorder %s19, 1
      %p100 = por %p98, %p99
      %p101 = scmp.ne.s32.totalorder %s93, %s96
      %p102 = scmp.eq.s32.totalorder %s19, 0
      %p103 = por %p101, %p102
      %p104 = scmp.ne.s32.totalorder %s93, %s96
      %p105 = scmp.eq.s32.totalorder %s24, 1
      %p106 = por %p104, %p105
      %p107 = scmp.ne.s32.totalorder %s96, %s97
      %p108 = scmp.eq.s32.totalorder %s24, 0
      %p109 = por %p107, %p108
      %p110 = scmp.ne.s32.totalorder %s96, %s97
      %p111 = scmp.eq.s32.totalorder %s25, 1
      %p112 = por %p110, %p111
      %p114 = scmp.ne.s32.totalorder %s97, %s113
      %p115 = scmp.eq.s32.totalorder %s25, 0
      %p116 = por %p114, %p115
      %s117 = ssub.s32 %s27, %s34
      %p118 = scmp.eq.s32.totalorder %s117, 0
      %s120 = sadd.s32 %s119, 1
      %s121 = scalar_select %p118, %s119, %s120
      %p124 = pneg %p118
      %p125 = scmp.eq.s32.totalorder %s19, 1
      %p126 = por %p124, %p125
      %p127 = scmp.ne.s32.totalorder %s119, %s122
      %p128 = scmp.eq.s32.totalorder %s19, 0
      %p129 = por %p127, %p128
      %p130 = scmp.ne.s32.totalorder %s119, %s122
      %p131 = scmp.eq.s32.totalorder %s24, 1
      %p132 = por %p130, %p131
      %p133 = scmp.ne.s32.totalorder %s122, %s123
      %p134 = scmp.eq.s32.totalorder %s24, 0
      %p135 = por %p133, %p134
      %p136 = scmp.ne.s32.totalorder %s122, %s123
      %p137 = scmp.eq.s32.totalorder %s25, 1
      %p138 = por %p136, %p137
      %p140 = scmp.ne.s32.totalorder %s123, %s139
      %p141 = scmp.eq.s32.totalorder %s25, 0
      %p142 = por %p140, %p141
      %s143 = ssub.s32 %s27, %s34
      %s144 = ssub.s32 %s26, %s38
      %s145 = sor.u32 %s143, %s144
      %p146 = scmp.eq.s32.totalorder %s145, 0
      %s148 = sadd.s32 %s147, 1
      %s149 = scalar_select %p146, %s147, %s148
      %p152 = pneg %p146
      %p153 = scmp.eq.s32.totalorder %s19, 1
      %p154 = por %p152, %p153
      %p155 = scmp.ne.s32.totalorder %s147, %s150
      %p156 = scmp.eq.s32.totalorder %s19, 0
      %p157 = por %p155, %p156
      %p158 = scmp.ne.s32.totalorder %s147, %s150
      %p159 = scmp.eq.s32.totalorder %s24, 1
      %p160 = por %p158, %p159
      %p161 = scmp.ne.s32.totalorder %s150, %s151
      %p162 = scmp.eq.s32.totalorder %s24, 0
      %p163 = por %p161, %p162
      %p164 = scmp.ne.s32.totalorder %s150, %s151
      %p165 = scmp.eq.s32.totalorder %s25, 1
      %p166 = por %p164, %p165
      %p168 = scmp.ne.s32.totalorder %s151, %s167
      %p169 = scmp.eq.s32.totalorder %s25, 0
      %p170 = por %p168, %p169
      %s171 = ssub.s32 %s26, %s38
      %p172 = scmp.eq.s32.totalorder %s171, 0
      %s174 = sadd.s32 %s173, 1
      %s175 = scalar_select %p172, %s173, %s174
      %p178 = pneg %p172
      %p179 = scmp.eq.s32.totalorder %s19, 1
      %p180 = por %p178, %p179
      %p181 = scmp.ne.s32.totalorder %s173, %s176
      %p182 = scmp.eq.s32.totalorder %s19, 0
      %p183 = por %p181, %p182
      %p184 = scmp.ne.s32.totalorder %s173, %s176
      %p185 = scmp.eq.s32.totalorder %s24, 1
      %p186 = por %p184, %p185
      %p187 = scmp.ne.s32.totalorder %s176, %s177
      %p188 = scmp.eq.s32.totalorder %s24, 0
      %p189 = por %p187, %p188
      %p190 = scmp.ne.s32.totalorder %s176, %s177
      %p191 = scmp.eq.s32.totalorder %s25, 1
      %p192 = por %p190, %p191
      %p194 = scmp.ne.s32.totalorder %s177, %s193
      %p195 = scmp.eq.s32.totalorder %s25, 0
      %p196 = por %p194, %p195
      %p197 = scmp.le.s32.totalorder 1, %s19
      %p198 = scmp.lt.s32.totalorder %s19, 3
      %p199 = pnand %p197, %p198
      %p200 = pneg %p199
      // Predicated region
      $region9: #{tpu_custom_call.1} parent=5 // pred_check
        _
      $region10: #{tpu_custom_call.1} parent=5 // pred_check_branch
        %202 = sbr.rel (%p199) target = $region12
      $region11: #{tpu_custom_call.1} parent=5 // pred_region
        %s203 = ssub.s32 %s19, 1
        // Predicated region
        $region13: #{tpu_custom_call.1} parent=11 // pred_check
          %p204 = pneg %p57
        $region14: #{tpu_custom_call.1} parent=11 // pred_check_branch
          %206 = sbr.rel (%p204) target = $region16
        $region15: #{tpu_custom_call.1} parent=11 // pred_region
          %s207 = smul.u32 16, %s29
          %s209 = ssub.s32 1024, 1024
          %210 = vsyncadd [#allocation4], %s209
          %s211 = smul.addr %s207, 2
          %s212 = smul.addr %s211, 32
          %s213 = scalar_lea.hbm %s0, %s212
          %s214 = sshll.u32 [#allocation3], 4
          %s215 = int_to_ptr.vmem [resolvable:$true] %s214
          %220 = dma.hbm_to_vmem [thread:$0]  %s213, 1024, %s215, [#allocation4], 64, 64, 4
        $region16: #{tpu_custom_call.1} parent=11 // pred_fallthru
          _
        // Predicated region
        $region17: #{tpu_custom_call.1} parent=11 // pred_check
          %p221 = pneg %p135
        $region18: #{tpu_custom_call.1} parent=11 // pred_check_branch
          %223 = sbr.rel (%p221) target = $region20
        $region19: #{tpu_custom_call.1} parent=11 // pred_region
          %s224 = smul.u32 2, %s29
          %p225 = scmp.lt.s32.totalorder %s224, 1
          %s226 = scalar_select %p225, %s224, 1
          %s227 = smul.addr %s226, 8
          %s228 = scalar_lea.vmem %s3, %s227
          %s229 = smul.u32 2, %s29
        $region20: #{tpu_custom_call.1} parent=11 // pred_fallthru
          _
      $region12: #{tpu_custom_call.1} parent=5 // pred_fallthru
        _
      %p230 = scmp.lt.s32.totalorder %s19, 2
      // Predicated region
      $region21: #{tpu_custom_call.1} parent=5 // pred_check
        %p231 = pneg %p230
      $region22: #{tpu_custom_call.1} parent=5 // pred_check_branch
        %233 = sbr.rel (%p231) target = $region24
      $region23: #{tpu_custom_call.1} parent=5 // pred_region
        // Predicated region
        $region25: #{tpu_custom_call.1} parent=23 // pred_check
          %p234 = pneg %p77
        $region26: #{tpu_custom_call.1} parent=23 // pred_check_branch
          %236 = sbr.rel (%p234) target = $region28
        $region27: #{tpu_custom_call.1} parent=23 // pred_region
          %p237 = scmp.lt.s32.totalorder %s26, 1
          %s238 = scalar_select %p237, %s26, 1
          %s239 = smul.addr %s238, 2
          %s240 = scalar_lea.vmem %s1, %s239
        $region28: #{tpu_custom_call.1} parent=23 // pred_fallthru
          _
        // Predicated region
        $region29: #{tpu_custom_call.1} parent=23 // pred_check
          %p241 = pneg %p103
        $region30: #{tpu_custom_call.1} parent=23 // pred_check_branch
          %243 = sbr.rel (%p241) target = $region32
        $region31: #{tpu_custom_call.1} parent=23 // pred_region
          %p244 = scmp.lt.s32.totalorder %s26, 1
          %s245 = scalar_select %p244, %s26, 1
          %s246 = scalar_lea.vmem %s2, %s245
        $region32: #{tpu_custom_call.1} parent=23 // pred_fallthru
          _
      $region24: #{tpu_custom_call.1} parent=5 // pred_fallthru
        _
      %p247 = scmp.le.s32.totalorder 1, %s19
      %p248 = scmp.lt.s32.totalorder %s19, 3
      %p249 = pnand %p247, %p248
      %p250 = pneg %p249
      // Predicated region
      $region33: #{tpu_custom_call.1} parent=5 // pred_check
        _
      $region34: #{tpu_custom_call.1} parent=5 // pred_check_branch
        %252 = sbr.rel (%p249) target = $region36
      $region35: #{tpu_custom_call.1} parent=5 // pred_region
        %s253 = ssub.s32 %s19, 1
        // Predicated region
        $region37: #{tpu_custom_call.1} parent=35 // pred_check
          %p254 = pneg %p57
        $region38: #{tpu_custom_call.1} parent=35 // pred_check_branch
          %256 = sbr.rel (%p254) target = $region40
        $region39: #{tpu_custom_call.1} parent=35 // pred_region
          %257 = dma.done [#allocation4], 1024
        $region40: #{tpu_custom_call.1} parent=35 // pred_fallthru
          _
        %p258 = pneg %p57
        %p259 = pneg %p54
        %p260 = scmp.lt.s32.totalorder %s28, 1
        %s261 = scalar_select %p260, %s28, 1
        %s262 = smul.addr %s261, 2
        %s263 = scalar_lea.vmem %s1, %s262
        %p264 = pneg %p83
        %p265 = pneg %p80
        %p266 = scmp.lt.s32.totalorder %s28, 1
        %s267 = scalar_select %p266, %s28, 1
        %s268 = scalar_lea.vmem %s2, %s267
        %p269 = pneg %p109
        %p270 = pneg %p106
        %s271 = smul.u32 2, %s29
        %p272 = scmp.lt.s32.totalorder %s271, 1
        %s273 = scalar_select %p272, %s271, 1
        %s274 = smul.addr %s273, 8
        %s275 = scalar_lea.vmem %s3, %s274
        %p276 = pneg %p135
        %p277 = pneg %p132
        %p278 = pneg %p163
        %p279 = pneg %p160
        %s280 = sand.u32 %s150, 1
        %s281 = scalar_lea.sflag [#allocation5], %s280
        %s282 = sand.u32 %s150, 1
        %s283 = smul.addr %s282, 16
        %s284 = scalar_lea.vmem [#allocation6], %s283
        %p285 = pneg %p189
        %p286 = pneg %p186
        %s287 = sand.u32 %s176, 1
        %s288 = scalar_lea.sflag [#allocation8], %s287
        %s289 = sand.u32 %s176, 1
        %s290 = smul.addr %s289, 8
        %s291 = scalar_lea.vmem [#allocation7], %s290
        %s292 = smul.u32 16, %s29
        %p293 = scmp.lt.s32.totalorder %s28, 1
        %s294 = scalar_select %p293, %s28, 1
        %s295 = smul.addr %s294, 2
        %s296 = scalar_lea.vmem %s1, %s295
        %p297 = scmp.lt.s32.totalorder %s28, 1
        %s298 = scalar_select %p297, %s28, 1
        %s299 = scalar_lea.vmem %s2, %s298
        %s300 = smul.u32 2, %s29
        %p301 = scmp.lt.s32.totalorder %s300, 1
        %s302 = scalar_select %p301, %s300, 1
        %s303 = smul.addr %s302, 8
        %s304 = scalar_lea.vmem %s3, %s303
        %s305 = smul.u32 2, %s29
        %s306 = smul.u32 2, %s29
        %p308 = scmp.eq.s32.totalorder %s29, 0
        // Predicated region
        $region41: #{tpu_custom_call.1} parent=35 // pred_check
          %p309 = pneg %p308
        $region42: #{tpu_custom_call.1} parent=35 // pred_check_branch
          %311 = sbr.rel (%p309) target = $region44
        $region43: #{tpu_custom_call.1} parent=35 // pred_region
          %312 = vst [vmem:[%s291] sm:$0xff] 0.0
          %vm313 = vcmask 7168
          %314 = vst.msk [vmem:[#allocation2] sm:$0xff] %vm313, 0.0
        $region44: #{tpu_custom_call.1} parent=35 // pred_fallthru
          _
        %v315 = vld [vmem:[#allocation3] sm:$0xf]
        %v316 = vld [vmem:[#allocation3 + $0x4] sm:$0xf]
        %v317 = vld [vmem:[#allocation3 + $0x8] sm:$0xf]
        %v318 = vld [vmem:[#allocation3 + $0xc] sm:$0xf]
        %v319 = vld [vmem:[#allocation3 + $0x10] sm:$0xf]
        %v320 = vld [vmem:[#allocation3 + $0x14] sm:$0xf]
        %v321 = vld [vmem:[#allocation3 + $0x18] sm:$0xf]
        %v322 = vld [vmem:[#allocation3 + $0x1c] sm:$0xf]
        %v323 = vld [vmem:[#allocation3 + $0x20] sm:$0xf]
        %v324 = vld [vmem:[#allocation3 + $0x24] sm:$0xf]
        %v325 = vld [vmem:[#allocation3 + $0x28] sm:$0xf]
        %v326 = vld [vmem:[#allocation3 + $0x2c] sm:$0xf]
        %v327 = vld [vmem:[#allocation3 + $0x30] sm:$0xf]
        %v328 = vld [vmem:[#allocation3 + $0x34] sm:$0xf]
        %v329 = vld [vmem:[#allocation3 + $0x38] sm:$0xf]
        %v330 = vld [vmem:[#allocation3 + $0x3c] sm:$0xf]
        %v331 = vunpack.c.l.bf16 %v315
        %v332 = vunpack.c.l.bf16 %v316
        %v333 = vunpack.c.l.bf16 %v317
        %v334 = vunpack.c.l.bf16 %v318
        %v335 = vunpack.c.l.bf16 %v319
        %v336 = vunpack.c.l.bf16 %v320
        %v337 = vunpack.c.l.bf16 %v321
        %v338 = vunpack.c.l.bf16 %v322
        %v339 = vunpack.c.l.bf16 %v323
        %v340 = vunpack.c.l.bf16 %v324
        %v341 = vunpack.c.l.bf16 %v325
        %v342 = vunpack.c.l.bf16 %v326
        %v343 = vunpack.c.l.bf16 %v327
        %v344 = vunpack.c.l.bf16 %v328
        %v345 = vunpack.c.l.bf16 %v329
        %v346 = vunpack.c.l.bf16 %v330
        %v363 = vcombine.high %v331, %v331
        %v364 = vcombine.high %v332, %v332
        %v365 = vcombine.high %v333, %v333
        %v366 = vcombine.high %v334, %v334
        %v367 = vcombine.high %v335, %v335
        %v368 = vcombine.high %v336, %v336
        %v369 = vcombine.high %v337, %v337
        %v370 = vcombine.high %v338, %v338
        %v371 = vcombine.high %v339, %v339
        %v372 = vcombine.high %v340, %v340
        %v373 = vcombine.high %v341, %v341
        %v374 = vcombine.high %v342, %v342
        %v375 = vcombine.high %v343, %v343
        %v376 = vcombine.high %v344, %v344
        %v377 = vcombine.high %v345, %v345
        %v378 = vcombine.high %v346, %v346
        %vm395 = vcmask 1043456
        %v396 = vsel %vm395, %v331, 0.0
        %v397 = vsel %vm395, %v363, 0.0
        %v398 = vadd.f32 %v396, %v397
        %399 = vadd.xlane.f32.xlu0 %v398
        %v400 = vpop.xlane.xlu0 %399
        %v401 = vsel %vm395, %v332, 0.0
        %v402 = vsel %vm395, %v364, 0.0
        %v403 = vadd.f32 %v401, %v402
        %404 = vadd.xlane.f32.xlu0 %v403
        %v405 = vpop.xlane.xlu0 %404
        %v406 = vsel %vm395, %v333, 0.0
        %v407 = vsel %vm395, %v365, 0.0
        %v408 = vadd.f32 %v406, %v407
        %409 = vadd.xlane.f32.xlu0 %v408
        %v410 = vpop.xlane.xlu0 %409
        %v411 = vsel %vm395, %v334, 0.0
        %v412 = vsel %vm395, %v366, 0.0
        %v413 = vadd.f32 %v411, %v412
        %414 = vadd.xlane.f32.xlu0 %v413
        %v415 = vpop.xlane.xlu0 %414
        %v416 = vsel %vm395, %v335, 0.0
        %v417 = vsel %vm395, %v367, 0.0
        %v418 = vadd.f32 %v416, %v417
        %419 = vadd.xlane.f32.xlu0 %v418
        %v420 = vpop.xlane.xlu0 %419
        %v421 = vsel %vm395, %v336, 0.0
        %v422 = vsel %vm395, %v368, 0.0
        %v423 = vadd.f32 %v421, %v422
        %424 = vadd.xlane.f32.xlu0 %v423
        %v425 = vpop.xlane.xlu0 %424
        %v426 = vsel %vm395, %v337, 0.0
        %v427 = vsel %vm395, %v369, 0.0
        %v428 = vadd.f32 %v426, %v427
        %429 = vadd.xlane.f32.xlu0 %v428
        %v430 = vpop.xlane.xlu0 %429
        %v431 = vsel %vm395, %v338, 0.0
        %v432 = vsel %vm395, %v370, 0.0
        %v433 = vadd.f32 %v431, %v432
        %434 = vadd.xlane.f32.xlu0 %v433
        %v435 = vpop.xlane.xlu0 %434
        %v436 = vsel %vm395, %v339, 0.0
        %v437 = vsel %vm395, %v371, 0.0
        %v438 = vadd.f32 %v436, %v437
        %439 = vadd.xlane.f32.xlu0 %v438
        %v440 = vpop.xlane.xlu0 %439
        %v441 = vsel %vm395, %v340, 0.0
        %v442 = vsel %vm395, %v372, 0.0
        %v443 = vadd.f32 %v441, %v442
        %444 = vadd.xlane.f32.xlu0 %v443
        %v445 = vpop.xlane.xlu0 %444
        %v446 = vsel %vm395, %v341, 0.0
        %v447 = vsel %vm395, %v373, 0.0
        %v448 = vadd.f32 %v446, %v447
        %449 = vadd.xlane.f32.xlu0 %v448
        %v450 = vpop.xlane.xlu0 %449
        %v451 = vsel %vm395, %v342, 0.0
        %v452 = vsel %vm395, %v374, 0.0
        %v453 = vadd.f32 %v451, %v452
        %454 = vadd.xlane.f32.xlu0 %v453
        %v455 = vpop.xlane.xlu0 %454
        %v456 = vsel %vm395, %v343, 0.0
        %v457 = vsel %vm395, %v375, 0.0
        %v458 = vadd.f32 %v456, %v457
        %459 = vadd.xlane.f32.xlu0 %v458
        %v460 = vpop.xlane.xlu0 %459
        %v461 = vsel %vm395, %v344, 0.0
        %v462 = vsel %vm395, %v376, 0.0
        %v463 = vadd.f32 %v461, %v462
        %464 = vadd.xlane.f32.xlu0 %v463
        %v465 = vpop.xlane.xlu0 %464
        %v466 = vsel %vm395, %v345, 0.0
        %v467 = vsel %vm395, %v377, 0.0
        %v468 = vadd.f32 %v466, %v467
        %469 = vadd.xlane.f32.xlu0 %v468
        %v470 = vpop.xlane.xlu0 %469
        %v471 = vsel %vm395, %v346, 0.0
        %v472 = vsel %vm395, %v378, 0.0
        %v473 = vadd.f32 %v471, %v472
        %474 = vadd.xlane.f32.xlu0 %v473
        %v475 = vpop.xlane.xlu0 %474
        %v476 = vrcp.pop 256.0
        %v477 = vmul.f32 %v400, %v476
        %v478 = vmul.f32 %v405, %v476
        %v479 = vmul.f32 %v410, %v476
        %v480 = vmul.f32 %v415, %v476
        %v481 = vmul.f32 %v420, %v476
        %v482 = vmul.f32 %v425, %v476
        %v483 = vmul.f32 %v430, %v476
        %v484 = vmul.f32 %v435, %v476
        %v485 = vmul.f32 %v440, %v476
        %v486 = vmul.f32 %v445, %v476
        %v487 = vmul.f32 %v450, %v476
        %v488 = vmul.f32 %v455, %v476
        %v489 = vmul.f32 %v460, %v476
        %v490 = vmul.f32 %v465, %v476
        %v491 = vmul.f32 %v470, %v476
        %v492 = vmul.f32 %v475, %v476
        %v493 = vpack.c.bf16 %v477, %v477
        %v494 = vpack.c.bf16 %v478, %v478
        %v495 = vpack.c.bf16 %v479, %v479
        %v496 = vpack.c.bf16 %v480, %v480
        %v497 = vpack.c.bf16 %v481, %v481
        %v498 = vpack.c.bf16 %v482, %v482
        %v499 = vpack.c.bf16 %v483, %v483
        %v500 = vpack.c.bf16 %v484, %v484
        %v501 = vpack.c.bf16 %v485, %v485
        %v502 = vpack.c.bf16 %v486, %v486
        %v503 = vpack.c.bf16 %v487, %v487
        %v504 = vpack.c.bf16 %v488, %v488
        %v505 = vpack.c.bf16 %v489, %v489
        %v506 = vpack.c.bf16 %v490, %v490
        %v507 = vpack.c.bf16 %v491, %v491
        %v508 = vpack.c.bf16 %v492, %v492
        %v509 = vld [vmem:[%s296] sm:$0x3]
        %v510 = vld [vmem:[%s299] sm:$0x1]
        %v512 = vlaneseq
        %v513 = vshrl.u32 %v512, 7
        %v514 = vsub.s32 0, %v513
        %v515 = vrot.slane %v510, %v514
        %v533 = vunpack.c.l.b16 %v493
        %v534 = vunpack.c.l.b16 %v494
        %v535 = vunpack.c.l.b16 %v495
        %v536 = vunpack.c.l.b16 %v496
        %v537 = vunpack.c.l.b16 %v497
        %v538 = vunpack.c.l.b16 %v498
        %v539 = vunpack.c.l.b16 %v499
        %v540 = vunpack.c.l.b16 %v500
        %v541 = vunpack.c.l.b16 %v501
        %v542 = vunpack.c.l.b16 %v502
        %v543 = vunpack.c.l.b16 %v503
        %v544 = vunpack.c.l.b16 %v504
        %v545 = vunpack.c.l.b16 %v505
        %v546 = vunpack.c.l.b16 %v506
        %v547 = vunpack.c.l.b16 %v507
        %v548 = vunpack.c.l.b16 %v508
        %v549 = vlaneseq
        %v550 = vand.u32 %v549, 127
        %v551 = vlaneseq
        %v552 = vshrl.u32 %v551, 7
        %v553 = vsub.s32 %v550, %v552
        %v554 = vrot.slane %v533, %v553
        %v555 = vlaneseq
        %v556 = vshrl.u32 %v555, 7
        %v557 = vsub.s32 %v550, %v556
        %v558 = vrot.slane %v534, %v557
        %v559 = vlaneseq
        %v560 = vshrl.u32 %v559, 7
        %v561 = vsub.s32 %v550, %v560
        %v562 = vrot.slane %v535, %v561
        %v563 = vlaneseq
        %v564 = vshrl.u32 %v563, 7
        %v565 = vsub.s32 %v550, %v564
        %v566 = vrot.slane %v536, %v565
        %v567 = vlaneseq
        %v568 = vshrl.u32 %v567, 7
        %v569 = vsub.s32 %v550, %v568
        %v570 = vrot.slane %v537, %v569
        %v571 = vlaneseq
        %v572 = vshrl.u32 %v571, 7
        %v573 = vsub.s32 %v550, %v572
        %v574 = vrot.slane %v538, %v573
        %v575 = vlaneseq
        %v576 = vshrl.u32 %v575, 7
        %v577 = vsub.s32 %v550, %v576
        %v578 = vrot.slane %v539, %v577
        %v579 = vlaneseq
        %v580 = vshrl.u32 %v579, 7
        %v581 = vsub.s32 %v550, %v580
        %v582 = vrot.slane %v540, %v581
        %v583 = vlaneseq
        %v584 = vshrl.u32 %v583, 7
        %v585 = vsub.s32 %v550, %v584
        %v586 = vrot.slane %v541, %v585
        %v587 = vlaneseq
        %v588 = vshrl.u32 %v587, 7
        %v589 = vsub.s32 %v550, %v588
        %v590 = vrot.slane %v542, %v589
        %v591 = vlaneseq
        %v592 = vshrl.u32 %v591, 7
        %v593 = vsub.s32 %v550, %v592
        %v594 = vrot.slane %v543, %v593
        %v595 = vlaneseq
        %v596 = vshrl.u32 %v595, 7
        %v597 = vsub.s32 %v550, %v596
        %v598 = vrot.slane %v544, %v597
        %v599 = vlaneseq
        %v600 = vshrl.u32 %v599, 7
        %v601 = vsub.s32 %v550, %v600
        %v602 = vrot.slane %v545, %v601
        %v603 = vlaneseq
        %v604 = vshrl.u32 %v603, 7
        %v605 = vsub.s32 %v550, %v604
        %v606 = vrot.slane %v546, %v605
        %v607 = vlaneseq
        %v608 = vshrl.u32 %v607, 7
        %v609 = vsub.s32 %v550, %v608
        %v610 = vrot.slane %v547, %v609
        %v611 = vlaneseq
        %v612 = vshrl.u32 %v611, 7
        %v613 = vsub.s32 %v550, %v612
        %v614 = vrot.slane %v548, %v613
        %vm615 = vcmask 1041409
        %v616 = vsel %vm615, %v558, %v554
        %vm617 = vcmask 1042434
        %v618 = vsel %vm617, %v562, %v616
        %vm619 = vcmask 1043459
        %v620 = vsel %vm619, %v566, %v618
        %vm621 = vcmask 1044484
        %v622 = vsel %vm621, %v570, %v620
        %vm623 = vcmask 1045509
        %v624 = vsel %vm623, %v574, %v622
        %vm625 = vcmask 1046534
        %v626 = vsel %vm625, %v578, %v624
        %vm627 = vcmask 1047559
        %v628 = vsel %vm627, %v582, %v626
        %v629 = vsel %vm615, %v590, %v586
        %v630 = vsel %vm617, %v594, %v629
        %v631 = vsel %vm619, %v598, %v630
        %v632 = vsel %vm621, %v602, %v631
        %v633 = vsel %vm623, %v606, %v632
        %v634 = vsel %vm625, %v610, %v633
        %v635 = vsel %vm627, %v614, %v634
        %v636 = vpack.c.b16 %v635, %v628
        %vm637 = vcmask 31744
        %v639 = vsel %vm637, %v636, 0
        %vm641 = vcmask 1041408
        %v643 = vsel %vm641, %v509, 0
        %645 = vmatprep.subr.bf16.mxu0 0
        %646 = vmatpush1.bf16.msra.mxu0 %v643
        %647 = vmatprep.subr.bf16.mxu0 0
        %648 = vmatpush1.bf16.msra.mxu0 0
        %649 = vmatprep.subr.bf16.mxu0 0
        %650 = vmatpush1.bf16.msra.mxu0 0
        %651 = vmatprep.subr.bf16.mxu0 0
        %652 = vmatpush1.bf16.msra.mxu0 0
        %653 = vmatprep.subr.bf16.mxu0 0
        %654 = vmatpush1.bf16.msra.mxu0 0
        %655 = vmatprep.subr.bf16.mxu0 0
        %656 = vmatpush1.bf16.msra.mxu0 0
        %657 = vmatprep.subr.bf16.mxu0 0
        %658 = vmatpush1.bf16.msra.mxu0 0
        %659 = vmatprep.subr.bf16.mxu0 0
        %660 = vmatpush1.bf16.msra.mxu0 0
        %661 = vmatprep.subr.bf16.mxu0 0
        %662 = vmatpush1.bf16.msra.mxu0 0
        %663 = vmatprep.subr.bf16.mxu0 0
        %664 = vmatpush1.bf16.msra.mxu0 0
        %665 = vmatprep.subr.bf16.mxu0 0
        %666 = vmatpush1.bf16.msra.mxu0 0
        %667 = vmatprep.subr.bf16.mxu0 0
        %668 = vmatpush1.bf16.msra.mxu0 0
        %669 = vmatprep.subr.bf16.mxu0 0
        %670 = vmatpush1.bf16.msra.mxu0 0
        %671 = vmatprep.subr.bf16.mxu0 0
        %672 = vmatpush1.bf16.msra.mxu0 0
        %673 = vmatprep.subr.bf16.mxu0 0
        %674 = vmatpush1.bf16.msra.mxu0 0
        %675 = vmatprep.subr.bf16.mxu0 0
        %676 = vmatpush1.bf16.msra.mxu0 0
        %677 = vmatprep.mubr.bf16.mxu0 0
        %678 = vmatmul.mubr.bf16.gmra.mrb[0].mxu0 %v639
        %v679 = vpop.f32.mrb[0].mxu0
        %v680 = vadd.f32 %v515, %v679
        %v681 = vpop.f32.mrb[0].mxu0
        %v682 = vpop.f32.mrb[0].mxu0
        %v683 = vadd.f32 %v515, %v682
        %v684 = vpop.f32.mrb[0].mxu0
        %685 = vdwg.mxu0
        %686 = vst [vmem:[%s284] sm:$0xff] %v680
        %687 = vst [vmem:[%s284 + $0x8] sm:$0xff] %v683
        %v688 = vld [vmem:[%s304] sm:$0xff]
        %v689 = vld [vmem:[%s304 + $0x8] sm:$0xff]
        %v690 = vld [vmem:[%s291] sm:$0xff]
        %691 = vxpose.xlu0.b32.start [1/16] %v688, 128
        %692 = vxpose.xlu0.b32.cont [2/16] %v689, 128
        %693 = vxpose.xlu0.b32.cont [3/16] 0.0, 128
        %694 = vxpose.xlu0.b32.cont [4/16] 0.0, 128
        %695 = vxpose.xlu0.b32.cont [5/16] 0.0, 128
        %696 = vxpose.xlu0.b32.cont [6/16] 0.0, 128
        %697 = vxpose.xlu0.b32.cont [7/16] 0.0, 128
        %698 = vxpose.xlu0.b32.cont [8/16] 0.0, 128
        %699 = vxpose.xlu0.b32.cont [9/16] 0.0, 128
        %700 = vxpose.xlu0.b32.cont [10/16] 0.0, 128
        %701 = vxpose.xlu0.b32.cont [11/16] 0.0, 128
        %702 = vxpose.xlu0.b32.cont [12/16] 0.0, 128
        %703 = vxpose.xlu0.b32.cont [13/16] 0.0, 128
        %704 = vxpose.xlu0.b32.cont [14/16] 0.0, 128
        %705 = vxpose.xlu0.b32.cont [15/16] 0.0, 128
        %706 = vxpose.xlu0.b32.end [16/16] 0.0, 128
        %v707 = vpop.trf.xlu0
        %v708 = vpop.trf.xlu0
        %v709 = vpop.trf.xlu0
        %v710 = vpop.trf.xlu0
        %v711 = vpop.trf.xlu0
        %v712 = vpop.trf.xlu0
        %v713 = vpop.trf.xlu0
        %v714 = vpop.trf.xlu0
        %v715 = vpop.trf.xlu0
        %v716 = vpop.trf.xlu0
        %v717 = vpop.trf.xlu0
        %v718 = vpop.trf.xlu0
        %v719 = vpop.trf.xlu0
        %v720 = vpop.trf.xlu0
        %v721 = vpop.trf.xlu0
        %v722 = vpop.trf.xlu0
        %vm723 = vcmask 130048
        %v725 = vsel %vm723, %v707, 0
        %727 = vmatprep.subr.mxu0 0.0
        %728 = vmatpush1.msra.mxu0 %v680
        %729 = vmatprep.subr.mxu0 0.0
        %730 = vmatpush1.msra.mxu0 %v683
        %731 = vmatprep.subr.mxu0 0.0
        %732 = vmatpush1.msra.mxu0 0.0
        %733 = vmatprep.subr.mxu0 0.0
        %734 = vmatpush1.msra.mxu0 0.0
        %735 = vmatprep.subr.mxu0 0.0
        %736 = vmatpush1.msra.mxu0 0.0
        %737 = vmatprep.subr.mxu0 0.0
        %738 = vmatpush1.msra.mxu0 0.0
        %739 = vmatprep.subr.mxu0 0.0
        %740 = vmatpush1.msra.mxu0 0.0
        %741 = vmatprep.subr.mxu0 0.0
        %742 = vmatpush1.msra.mxu0 0.0
        %743 = vmatprep.subr.mxu0 0.0
        %744 = vmatpush1.msra.mxu0 0.0
        %745 = vmatprep.subr.mxu0 0.0
        %746 = vmatpush1.msra.mxu0 0.0
        %747 = vmatprep.subr.mxu0 0.0
        %748 = vmatpush1.msra.mxu0 0.0
        %749 = vmatprep.subr.mxu0 0.0
        %750 = vmatpush1.msra.mxu0 0.0
        %751 = vmatprep.subr.mxu0 0.0
        %752 = vmatpush1.msra.mxu0 0.0
        %753 = vmatprep.subr.mxu0 0.0
        %754 = vmatpush1.msra.mxu0 0.0
        %755 = vmatprep.subr.mxu0 0.0
        %756 = vmatpush1.msra.mxu0 0.0
        %757 = vmatprep.subr.mxu0 0.0
        %758 = vmatpush1.msra.mxu0 0.0
        %759 = vmatprep.subr.mxu0 0.0
        %760 = vmatpush1.msra.mxu0 0.0
        %761 = vmatprep.subr.mxu0 0.0
        %762 = vmatpush1.msra.mxu0 0.0
        %763 = vmatprep.subr.mxu0 0.0
        %764 = vmatpush1.msra.mxu0 0.0
        %765 = vmatprep.subr.mxu0 0.0
        %766 = vmatpush1.msra.mxu0 0.0
        %767 = vmatprep.subr.mxu0 0.0
        %768 = vmatpush1.msra.mxu0 0.0
        %769 = vmatprep.subr.mxu0 0.0
        %770 = vmatpush1.msra.mxu0 0.0
        %771 = vmatprep.subr.mxu0 0.0
        %772 = vmatpush1.msra.mxu0 0.0
        %773 = vmatprep.subr.mxu0 0.0
        %774 = vmatpush1.msra.mxu0 0.0
        %775 = vmatprep.subr.mxu0 0.0
        %776 = vmatpush1.msra.mxu0 0.0
        %777 = vmatprep.subr.mxu0 0.0
        %778 = vmatpush1.msra.mxu0 0.0
        %779 = vmatprep.subr.mxu0 0.0
        %780 = vmatpush1.msra.mxu0 0.0
        %781 = vmatprep.subr.mxu0 0.0
        %782 = vmatpush1.msra.mxu0 0.0
        %783 = vmatprep.subr.mxu0 0.0
        %784 = vmatpush1.msra.mxu0 0.0
        %785 = vmatprep.subr.mxu0 0.0
        %786 = vmatpush1.msra.mxu0 0.0
        %787 = vmatprep.subr.mxu0 0.0
        %788 = vmatpush1.msra.mxu0 0.0
        %789 = vmatprep.subr.mxu0 0.0
        %790 = vmatpush1.msra.mxu0 0.0
        %791 = vmatprep.mubr.f32.mxu0 0.0
        %792 = vmatmul.mubr.f32.gmra.mrb[0].mxu0 %v725
        %v793 = vpop.f32.mrb[0].mxu0
        %v794 = vadd.f32 0.0, %v793
        %v795 = vpop.f32.mrb[0].mxu0
        %796 = vdwg.mxu0
        %v797 = vadd.f32 %v690, %v794
        %798 = vst [vmem:[%s291] sm:$0xff] %v797
        %v799 = vld [vmem:[#allocation2] sm:$0xff]
        %vm800 = vcmask 64512
        %v801 = vsel %vm800, %v688, 0.0
        %v802 = vsel %vm800, %v689, 0.0
        %v803 = vadd.f32 %v801, %v802
        %v804 = vrot.slane %v803, 4
        %v805 = vadd.f32 %v803, %v804
        %v806 = vrot.slane %v805, 2
        %v807 = vadd.f32 %v805, %v806
        %v808 = vrot.slane %v807, 1
        %v809 = vadd.f32 %v807, %v808
        %811 = vbcast.lane.b32.xlu0 %v809, 256
        %v812 = vpop.permute.xlu0 %811
        %v813 = vadd.f32 %v799, %v812
        %vm814 = vcmask 7168
        %815 = vst.msk [vmem:[#allocation2] sm:$0xff] %vm814, %v813
        // Predicated region
        $region45: #{tpu_custom_call.1} parent=35 // pred_check
          %p816 = pneg %p308
        $region46: #{tpu_custom_call.1} parent=35 // pred_check_branch
          %818 = sbr.rel (%p816) target = $region48
        $region47: #{tpu_custom_call.1} parent=35 // pred_region
          %v819 = vld [vmem:[#allocation2] sm:$0xff]
          %v820 = vmax.f32 %v819, 1.0
          %v821 = vrcp.pop %v820
          %v822 = vld [vmem:[%s291] sm:$0xff]
          %824 = vset.pattern.permute.xlu0 0
          %825 = vperm.xlu0 %824, %v821
          %v826 = vpop.permute.xlu0 %825
          %v828 = vmul.f32 %v822, %v826
          %829 = vst [vmem:[%s291] sm:$0xff] %v828
        $region48: #{tpu_custom_call.1} parent=35 // pred_fallthru
          _
        %s830 = sand.u32 %s150, 1
        %s831 = scalar_lea.sflag [#allocation5], %s830
        %s832 = sand.u32 %s150, 1
        %s833 = smul.addr %s832, 16
        %s834 = scalar_lea.vmem [#allocation6], %s833
        %s835 = sand.u32 %s176, 1
        %s836 = scalar_lea.sflag [#allocation8], %s835
        %s837 = sand.u32 %s176, 1
        %s838 = smul.addr %s837, 8
        %s839 = scalar_lea.vmem [#allocation7], %s838
        // Predicated region
        $region49: #{tpu_custom_call.1} parent=35 // pred_check
          %p840 = pneg %p160
        $region50: #{tpu_custom_call.1} parent=35 // pred_check_branch
          %842 = sbr.rel (%p840) target = $region52
        $region51: #{tpu_custom_call.1} parent=35 // pred_region
          %s843 = smul.u32 2, %s29
          %s845 = ssub.s32 256, 256
          %846 = vsyncadd %s831, %s845
          %s847 = smul.addr %s843, 2
          %s848 = sadd.s32 %s28, %s847
          %s849 = smul.addr %s848, 128
          %s850 = scalar_lea.hbm %s4, %s849
          %s851 = sshll.u32 %s834, 4
          %s852 = int_to_ptr.vmem [resolvable:$true] %s851
          %857 = dma.vmem_to_hbm [thread:$0]  %s852, 256, %s850, %s831, 128, 256, 8
        $region52: #{tpu_custom_call.1} parent=35 // pred_fallthru
          _
        // Predicated region
        $region53: #{tpu_custom_call.1} parent=35 // pred_check
          %p858 = pneg %p186
        $region54: #{tpu_custom_call.1} parent=35 // pred_check_branch
          %860 = sbr.rel (%p858) target = $region56
        $region55: #{tpu_custom_call.1} parent=35 // pred_region
          %s862 = ssub.s32 128, 128
          %863 = vsyncadd %s836, %s862
          %s864 = smul.addr %s28, 128
          %s865 = scalar_lea.hbm %s5, %s864
          %s867 = sshll.u32 %s839, 4
          %s868 = int_to_ptr.vmem [resolvable:$true] %s867
          %870 = dma.vmem_to_hbm [thread:$0]  %s868, 128, %s865, %s836
        $region56: #{tpu_custom_call.1} parent=35 // pred_fallthru
          _
      $region36: #{tpu_custom_call.1} parent=5 // pred_fallthru
        _
      %p871 = scmp.le.s32.totalorder 2, %s19
      // Predicated region
      $region57: #{tpu_custom_call.1} parent=5 // pred_check
        %p872 = pneg %p871
      $region58: #{tpu_custom_call.1} parent=5 // pred_check_branch
        %874 = sbr.rel (%p872) target = $region60
      $region59: #{tpu_custom_call.1} parent=5 // pred_region
        %s875 = ssub.s32 %s19, 2
        // Predicated region
        $region61: #{tpu_custom_call.1} parent=59 // pred_check
          %p876 = pneg %p166
        $region62: #{tpu_custom_call.1} parent=59 // pred_check_branch
          %878 = sbr.rel (%p876) target = $region64
        $region63: #{tpu_custom_call.1} parent=59 // pred_region
          %s879 = sand.u32 %s151, 1
          %s880 = scalar_lea.sflag [#allocation5], %s879
          %s881 = sand.u32 %s151, 1
          %s882 = smul.addr %s881, 16
          %s883 = scalar_lea.vmem [#allocation6], %s882
          %884 = dma.done %s880, 256
        $region64: #{tpu_custom_call.1} parent=59 // pred_fallthru
          _
        // Predicated region
        $region65: #{tpu_custom_call.1} parent=59 // pred_check
          %p885 = pneg %p192
        $region66: #{tpu_custom_call.1} parent=59 // pred_check_branch
          %887 = sbr.rel (%p885) target = $region68
        $region67: #{tpu_custom_call.1} parent=59 // pred_region
          %s888 = sand.u32 %s177, 1
          %s889 = scalar_lea.sflag [#allocation8], %s888
          %s890 = sand.u32 %s177, 1
          %s891 = smul.addr %s890, 8
          %s892 = scalar_lea.vmem [#allocation7], %s891
          %893 = dma.done %s889, 128
        $region68: #{tpu_custom_call.1} parent=59 // pred_fallthru
          _
      $region60: #{tpu_custom_call.1} parent=5 // pred_fallthru
        _
    $region6: #{tpu_custom_call.1} parent=1 // loop_footer
      %s23 = sadd.s32 1, %s19
    $region7: #{tpu_custom_call.1} parent=1 // loop_footer_branch
      %18 = sbr.rel target = $region3
    $region8: #{tpu_custom_call.1} parent=1 // loop_exit
      _
    %894 = vsyncpa [#allocation4], 1
    %s895 = scalar_lea.sflag [#allocation4], 1
    %896 = vsyncpa %s895, 1
    %897 = vsyncpa [#allocation5], 1
    %s898 = scalar_lea.sflag [#allocation5], 1
    %899 = vsyncpa %s898, 1
    %900 = vsyncpa [#allocation8], 1
    %s901 = scalar_lea.sflag [#allocation8], 1
    %902 = vsyncpa %s901, 1

</llo_original>
